<compile_context>
chip_gen: v7x
topology: tpu7x:2x2x1
jax: 0.10.0
libtpu: 0.0.40
codegen_flags: <defaults>
</compile_context>

<pallas_src>
import functools

import jax
import jax.numpy as jnp
from jax.experimental import pallas as pl
from jax.experimental.pallas import tpu as pltpu


def _round_up(x, m):
    return ((x + m - 1) // m) * m


# --------------------------------- kernels ---------------------------------


def _linear_kernel_single_k(x_ref, wt_ref, b_ref, o_ref):
    """Fast path: the whole (padded) K fits one tile -> write output directly."""
    x = x_ref[...]
    w = wt_ref[...]
    if x.dtype != w.dtype:          # trace-time branch: cast x to bf16 for the MXU
        x = x.astype(w.dtype)
    o_ref[...] = (
        jnp.dot(x, w, preferred_element_type=jnp.float32) + b_ref[...]
    ).astype(o_ref.dtype)


def _linear_kernel_multi_k(x_ref, wt_ref, b_ref, o_ref):
    """General path: accumulate over the K grid axis directly into the f32 output
    block (it is resident across k because its index map ignores k)."""
    k = pl.program_id(2)

    @pl.when(k == 0)
    def _():
        o_ref[...] = jnp.zeros_like(o_ref)

    x = x_ref[...]
    w = wt_ref[...]
    if x.dtype != w.dtype:
        x = x.astype(w.dtype)
    o_ref[...] += jnp.dot(x, w, preferred_element_type=jnp.float32)

    @pl.when(k == pl.num_programs(2) - 1)
    def _():
        o_ref[...] += b_ref[...]    # (1, tn) bias broadcasts over the tm rows


# --------------------------- one-time weight prep ---------------------------


def prepare_weights(w, b, *, weight_dtype=jnp.bfloat16):
    """One-time layout / dtype prep (do at parameter-load time, NOT per forward):
      * transpose (out_dim, in_dim) -> (in_dim, out_dim)
      * zero-pad the contraction dim K to a multiple of 128 (zeros are exact)
      * cast the weight to bf16 so every TPU generation's MXU takes the fast path
        (accumulation, bias add and the output stay f32)
    # TODO(synk): on v7x an fp8 weight path (f32 accumulation) would roughly
    # double MXU throughput again; kept bf16 here to stay generation-portable.
    """
    out_dim, in_dim = w.shape
    wt = w.T.astype(weight_dtype)
    kp = _round_up(in_dim, 128)
    if kp != in_dim:
        wt = jnp.pad(wt, ((0, kp - in_dim), (0, 0)))
    return wt, b.reshape(1, out_dim).astype(jnp.float32)


# --------------------------------- forward ---------------------------------


@functools.partial(jax.jit, static_argnames=("tm_max", "tn_max", "tk_max"))
def lin_forward(x, wt, b, *, tm_max=512, tn_max=1024, tk_max=1024):
    """y = x @ wt + b  computed in a Pallas TPU kernel.

    x : (M, K)            f32 (or bf16) activations
    wt: (Kp, N)           pre-transposed, K-padded weight (see prepare_weights)
    b : (1, N) or (N,)    f32 bias
    Returns f32 (M, N), matching the f32 nn.Linear module.
    """
    M, K = x.shape
    Kp, N = wt.shape
    assert K <= Kp, "input feature dim larger than the weight's contraction dim"
    if b.ndim == 1:
        b = b.reshape(1, -1)
    assert b.shape[1] == N

    # --- K is the only axis that must be zero-padded for correctness.
    Kw = _round_up(Kp, 128)
    if Kw != Kp:  # only for weights that did not go through prepare_weights
        wt = jnp.pad(wt, ((0, Kw - Kp), (0, 0)))
    if Kw != K:   # x pad is <= 127 zero columns when weights were prepared
        x = jnp.pad(x, ((0, 0), (0, Kw - K)))

    # --- tile selection -----------------------------------------------------
    sub = 8 if x.dtype.itemsize >= 4 else 16          # f32 vs bf16 sublane tile
    tm = min(tm_max, _round_up(M, sub))
    lane = 256 if N > 128 else 128                     # 256-wide MXU on v6e/v7x
    tn = min(tn_max, _round_up(N, lane))
    # tk: largest 128-multiple <= tk_max that divides padded K (128 always does)
    tk = max(128, (min(tk_max, Kw) // 128) * 128)
    while Kw % tk != 0:
        tk -= 128
    # v7x has 2 TensorCores: make sure the 'parallel' grid has >= 2 blocks.
    if pl.cdiv(M, tm) * pl.cdiv(N, tn) < 2:
        if N > 256:
            tn = _round_up(pl.cdiv(N, 2), 256)
        elif M > 2 * sub:
            tm = _round_up(pl.cdiv(M, 2), sub)

    nk = Kw // tk
    grid_mn = (pl.cdiv(M, tm), pl.cdiv(N, tn))
    out_shape = jax.ShapeDtypeStruct((M, N), jnp.float32)
    compiler_params = pltpu.CompilerParams(
        dimension_semantics=("parallel", "parallel")
        + (("arbitrary",) if nk > 1 else ()),
        # Explicit scoped-VMEM budget: above v5e's 16 MiB default, within every
        # generation's physical VMEM; double-buffered tiles fit in ~12 MiB.
        vmem_limit_bytes=32 * 1024 * 1024,
    )

    if nk == 1:
        # Single-K fast path: 2-D grid, no init/finalize branches.
        return pl.pallas_call(
            _linear_kernel_single_k,
            out_shape=out_shape,
            grid_spec=pltpu.PrefetchScalarGridSpec(
                num_scalar_prefetch=0,
                grid=grid_mn,
                in_specs=[
                    pl.BlockSpec((tm, Kw), lambda i, j: (i, 0)),   # x tile
                    pl.BlockSpec((Kw, tn), lambda i, j: (0, j)),   # wt tile
                    pl.BlockSpec((1, tn), lambda i, j: (0, j)),    # bias tile
                ],
                out_specs=pl.BlockSpec((tm, tn), lambda i, j: (i, j)),
            ),
            compiler_params=compiler_params,
        )(x, wt, b)

    # General path: reduction axis last, accumulate directly into the f32 output.
    return pl.pallas_call(
        _linear_kernel_multi_k,
        out_shape=out_shape,
        grid_spec=pltpu.PrefetchScalarGridSpec(
            num_scalar_prefetch=0,
            grid=grid_mn + (nk,),
            in_specs=[
                pl.BlockSpec((tm, tk), lambda i, j, k: (i, k)),   # x tile
                pl.BlockSpec((tk, tn), lambda i, j, k: (k, j)),   # wt tile
                pl.BlockSpec((1, tn), lambda i, j, k: (0, j)),    # bias tile
            ],
            out_specs=pl.BlockSpec((tm, tn), lambda i, j, k: (i, j)),
        ),
        compiler_params=compiler_params,
    )(x, wt, b)


# ----------------------------------- demo -----------------------------------

if __name__ == "__main__":
    # Module config: LIN(num_layers, in_dim, hidden_dim, out_dim).
    # Only linear1(in_dim, out_dim) is used in forward.
    batch, in_dim, hidden_dim, out_dim = 8, 128, 32, 128

    key = jax.random.PRNGKey(0)
    kx, kw, kb = jax.random.split(key, 3)

    x = jax.random.normal(kx, (batch, in_dim), dtype=jnp.float32)
    # PyTorch nn.Linear parameter shapes: W (out, in), b (out,)
    w = jax.random.normal(kw, (out_dim, in_dim), dtype=jnp.float32) * 0.05
    b = jax.random.normal(kb, (out_dim,), dtype=jnp.float32) * 0.05

    # One-time weight prep (transpose + K pad + bf16 cast), outside the hot path.
    wt, b_prep = prepare_weights(w, b)

    y = lin_forward(x, wt, b_prep)
    jax.block_until_ready(y)

    # Cross-check against the pure-JAX f32 reference of nn.Linear
    # (bf16 weights on the MXU -> loosened tolerances).
    y_ref = x @ w.T + b
    assert y.shape == (batch, out_dim)
    assert y.dtype == jnp.float32
    assert jnp.allclose(y, y_ref, atol=2e-2, rtol=2e-2)

    # Exercise the general path: multi-K accumulation, K not a multiple of 128
    # (per-call x pad), ragged M, and a 384-wide N (256-snapped tiles + masked
    # overhanging writes).  tk_max=512 forces >1 K step at this size.
    M2, K2, N2 = 200, 1000, 384
    k2x, k2w, k2b = jax.random.split(jax.random.PRNGKey(1), 3)
    x2 = jax.random.normal(k2x, (M2, K2), dtype=jnp.float32)
    w2 = jax.random.normal(k2w, (N2, K2), dtype=jnp.float32) * 0.02
    b2 = jax.random.normal(k2b, (N2,), dtype=jnp.float32) * 0.02
    wt2, b2_prep = prepare_weights(w2, b2)
    y2 = lin_forward(x2, wt2, b2_prep, tk_max=512)
    jax.block_until_ready(y2)
    y2_ref = x2 @ w2.T + b2
    assert y2.shape == (M2, N2)
    assert jnp.allclose(y2, y2_ref, atol=2e-2, rtol=2e-2)

    print("KERNEL_OK")
</pallas_src>

<mosaic_0001>
module attributes {stable_mosaic.version = 11 : i64} {
  func.func @_linear_kernel_single_k(%arg0: i32, %arg1: i32, %arg2: memref<8x128xf32, #tpu.memory_space<vmem>>, %arg3: memref<128x128xbf16, #tpu.memory_space<vmem>>, %arg4: memref<1x128xf32, #tpu.memory_space<vmem>>, %arg5: memref<8x128xf32, #tpu.memory_space<vmem>>) attributes {dimension_semantics = [#tpu.dimension_semantics<parallel>, #tpu.dimension_semantics<parallel>], iteration_bounds = array<i64: 1, 1>, scalar_prefetch = 0 : i64, scratch_operands = 0 : i64, tpu.core_type = #tpu.core_type<tc>, window_params = [{transform_indices = @transform_0, window_bounds = array<i64: 8, 128>}, {transform_indices = @transform_1, window_bounds = array<i64: 128, 128>}, {transform_indices = @transform_2, window_bounds = array<i64: 1, 128>}, {transform_indices = @transform_3, window_bounds = array<i64: 8, 128>}]} {
    %c0 = arith.constant 0 : index
    %c0_0 = arith.constant 0 : index
    %0 = vector.load %arg2[%c0, %c0_0] : memref<8x128xf32, #tpu.memory_space<vmem>>, vector<8x128xf32>
    %c0_1 = arith.constant 0 : index
    %c0_2 = arith.constant 0 : index
    %1 = vector.load %arg3[%c0_1, %c0_2] : memref<128x128xbf16, #tpu.memory_space<vmem>>, vector<128x128xbf16>
    %2 = arith.truncf %0 : vector<8x128xf32> to vector<8x128xbf16>
    %cst = arith.constant dense<0.000000e+00> : vector<8x128xf32>
    %3 = tpu.matmul %2, %1, %cst {dimension_numbers = #tpu.dot_dimension_numbers<[1], [0], [0], [1], [0, 0, 1, 1], [], []>} : vector<8x128xbf16>, vector<128x128xbf16>, vector<8x128xf32> -> vector<8x128xf32>
    %c0_3 = arith.constant 0 : index
    %c0_4 = arith.constant 0 : index
    %4 = vector.load %arg4[%c0_3, %c0_4] : memref<1x128xf32, #tpu.memory_space<vmem>>, vector<1x128xf32>
    %5 = vector.broadcast %4 : vector<1x128xf32> to vector<8x128xf32>
    %6 = arith.addf %3, %5 : vector<8x128xf32>
    %c0_5 = arith.constant 0 : index
    %c0_6 = arith.constant 0 : index
    %7 = vector.load %arg5[%c0_5, %c0_6] : memref<8x128xf32, #tpu.memory_space<vmem>>, vector<8x128xf32>
    tpu.vector_store %arg5[%c0_5, %c0_6], %6 {strides = array<i32>} : memref<8x128xf32, #tpu.memory_space<vmem>>, vector<8x128xf32>,
    return
  }
  func.func @transform_0(%arg0: i32, %arg1: i32) -> (i32, i32) {
    %c0_i32 = arith.constant 0 : i32
    %c0_i32_0 = arith.constant 0 : i32
    return %arg0, %c0_i32 : i32, i32
  }
  func.func @transform_1(%arg0: i32, %arg1: i32) -> (i32, i32) {
    %c0_i32 = arith.constant 0 : i32
    %c0_i32_0 = arith.constant 0 : i32
    return %c0_i32, %arg1 : i32, i32
  }
  func.func @transform_2(%arg0: i32, %arg1: i32) -> (i32, i32) {
    %c0_i32 = arith.constant 0 : i32
    %c0_i32_0 = arith.constant 0 : i32
    return %c0_i32, %arg1 : i32, i32
  }
  func.func @transform_3(%arg0: i32, %arg1: i32) -> (i32, i32) {
    %c0_i32 = arith.constant 0 : i32
    return %arg0, %arg1 : i32, i32
  }
}

</mosaic_0001>

<llo_original>
// kernel: lin_forward.1
$region0: #{lin_forward.1}
  #allocation0 [shape = 'u32[]', space=smem, size = 0x4, offset = 0x4, fixed_abs, tag = 'smem constant byte address 0x4 - core index']
  #allocation1 [shape = 'u32[144,128]{1,0:T(1,128)}', space=vmem, size = 0x12000, scoped, tag = 'internal scratch']
  %s0 = inlined_call_operand.hbm [shape: f32[8,128], index: 0, kind: input, shape index: {}]
  %s1 = inlined_call_operand.hbm [shape: bf16[128,128], index: 1, kind: input, shape index: {}]
  %s2 = inlined_call_operand.vmem [shape: f32[1,128], index: 2, kind: input, shape index: {}]
  %s3 = inlined_call_operand.hbm [shape: f32[8,128], index: 3, kind: output, shape index: {}]
  %s4 = sld [smem:[#allocation0]]
  $region30: #{lin_forward.1} parent=0
    _
  %s6 = ssub.s32 1, %s4
  %s7 = scalar_select 0, %s6, %s4
  $region1: #{lin_forward.1} parent=0
    #allocation2 [shape = 'u8[4096]{0}', space=vmem, size = 0x1000, scoped, tag = 'input window, operand 0, single buffered']
    #allocation3 [shape = 's32[1]{0}', space=sflag, size = 0x4, scoped, tag = 'scoped memory for lin_forward.1']
    #allocation4 [shape = 's32[1]{0}', space=sflag, size = 0x4, scoped, tag = 'scoped memory for lin_forward.1']
    #allocation5 [shape = 'u8[32768]{0}', space=vmem, size = 0x8000, scoped, tag = 'input window, operand 1, single buffered']
    #allocation6 [shape = 's32[1]{0}', space=sflag, size = 0x4, scoped, tag = 'scoped memory for lin_forward.1']
    #allocation7 [shape = 'u8[4096]{0}', space=vmem, size = 0x1000, scoped, tag = 'output window, operand 0, single buffered']
    %8 = vsyncpa [#allocation3], 0
    %9 = vsyncpa [#allocation6], 0
    %10 = vsyncpa [#allocation4], 0
    // Predicated region
    $region2: #{lin_forward.1} parent=1 // pred_check
      _
    $region3: #{lin_forward.1} parent=1 // pred_check_branch
      %12 = sbr.rel (0) target = $region5
    $region4: #{lin_forward.1} parent=1 // pred_region
      %s14 = ssub.s32 128, 128
      %15 = vsyncadd [#allocation3], %s14
      %s17 = sshll.u32 [#allocation2], 4
      %s18 = int_to_ptr.vmem [resolvable:$true] %s17
      %20 = dma.hbm_to_vmem [thread:$0]  %s0, 128, %s18, [#allocation3]
    $region5: #{lin_forward.1} parent=1 // pred_fallthru
      _
    // Predicated region
    $region6: #{lin_forward.1} parent=1 // pred_check
      _
    $region7: #{lin_forward.1} parent=1 // pred_check_branch
      %22 = sbr.rel (0) target = $region9
    $region8: #{lin_forward.1} parent=1 // pred_region
      %s24 = ssub.s32 1024, 1024
      %25 = vsyncadd [#allocation6], %s24
      %s26 = sshll.u32 [#allocation5], 4
      %s27 = int_to_ptr.vmem [resolvable:$true] %s26
      %32 = dma.hbm_to_vmem [thread:$0]  %s1, 1024, %s27, [#allocation6], 64, 64, 4
    $region9: #{lin_forward.1} parent=1 // pred_fallthru
      _
    // Predicated region
    $region10: #{lin_forward.1} parent=1 // pred_check
      _
    $region11: #{lin_forward.1} parent=1 // pred_check_branch
      %34 = sbr.rel (0) target = $region13
    $region12: #{lin_forward.1} parent=1 // pred_region
      _
    $region13: #{lin_forward.1} parent=1 // pred_fallthru
      _
    // Predicated region
    $region14: #{lin_forward.1} parent=1 // pred_check
      _
    $region15: #{lin_forward.1} parent=1 // pred_check_branch
      %36 = sbr.rel (0) target = $region17
    $region16: #{lin_forward.1} parent=1 // pred_region
      %37 = dma.done [#allocation3], 128
    $region17: #{lin_forward.1} parent=1 // pred_fallthru
      _
    // Predicated region
    $region18: #{lin_forward.1} parent=1 // pred_check
      _
    $region19: #{lin_forward.1} parent=1 // pred_check_branch
      %39 = sbr.rel (0) target = $region21
    $region20: #{lin_forward.1} parent=1 // pred_region
      %40 = dma.done [#allocation6], 1024
    $region21: #{lin_forward.1} parent=1 // pred_fallthru
      _
    %v42 = vld [vmem:[#allocation2] sm:$0xff]
    %v43 = vld [vmem:[#allocation5] sm:$0xf]
    %v44 = vld [vmem:[#allocation5 + $0x4] sm:$0xf]
    %v45 = vld [vmem:[#allocation5 + $0x8] sm:$0xf]
    %v46 = vld [vmem:[#allocation5 + $0xc] sm:$0xf]
    %v47 = vld [vmem:[#allocation5 + $0x10] sm:$0xf]
    %v48 = vld [vmem:[#allocation5 + $0x14] sm:$0xf]
    %v49 = vld [vmem:[#allocation5 + $0x18] sm:$0xf]
    %v50 = vld [vmem:[#allocation5 + $0x1c] sm:$0xf]
    %v51 = vld [vmem:[#allocation5 + $0x20] sm:$0xf]
    %v52 = vld [vmem:[#allocation5 + $0x24] sm:$0xf]
    %v53 = vld [vmem:[#allocation5 + $0x28] sm:$0xf]
    %v54 = vld [vmem:[#allocation5 + $0x2c] sm:$0xf]
    %v55 = vld [vmem:[#allocation5 + $0x30] sm:$0xf]
    %v56 = vld [vmem:[#allocation5 + $0x34] sm:$0xf]
    %v57 = vld [vmem:[#allocation5 + $0x38] sm:$0xf]
    %v58 = vld [vmem:[#allocation5 + $0x3c] sm:$0xf]
    %v59 = vpack.c.bf16 %v42, %v42
    %v60 = vld [vmem:[%s2] sm:$0x1]
    %v62 = vlaneseq
    %v63 = vshrl.u32 %v62, 7
    %v64 = vsub.s32 0, %v63
    %v65 = vrot.slane %v60, %v64
    %v83 = vunpack.c.l.b16 %v43
    %v84 = vunpack.c.l.b16 %v44
    %v85 = vunpack.c.l.b16 %v45
    %v86 = vunpack.c.l.b16 %v46
    %v87 = vunpack.c.l.b16 %v47
    %v88 = vunpack.c.l.b16 %v48
    %v89 = vunpack.c.l.b16 %v49
    %v90 = vunpack.c.l.b16 %v50
    %v91 = vunpack.c.l.b16 %v51
    %v92 = vunpack.c.l.b16 %v52
    %v93 = vunpack.c.l.b16 %v53
    %v94 = vunpack.c.l.b16 %v54
    %v95 = vunpack.c.l.b16 %v55
    %v96 = vunpack.c.l.b16 %v56
    %v97 = vunpack.c.l.b16 %v57
    %v98 = vunpack.c.l.b16 %v58
    %v99 = vpack.c.b16 %v84, %v83
    %v100 = vpack.c.b16 %v86, %v85
    %v101 = vpack.c.b16 %v88, %v87
    %v102 = vpack.c.b16 %v90, %v89
    %v103 = vpack.c.b16 %v92, %v91
    %v104 = vpack.c.b16 %v94, %v93
    %v105 = vpack.c.b16 %v96, %v95
    %v106 = vpack.c.b16 %v98, %v97
    %115 = vmatprep.subr.bf16.mxu0 0
    %116 = vmatpush1.bf16.msra.mxu0 %v99
    %117 = vmatprep.subr.bf16.mxu0 0
    %118 = vmatpush1.bf16.msra.mxu0 %v100
    %119 = vmatprep.subr.bf16.mxu0 0
    %120 = vmatpush1.bf16.msra.mxu0 %v101
    %121 = vmatprep.subr.bf16.mxu0 0
    %122 = vmatpush1.bf16.msra.mxu0 %v102
    %123 = vmatprep.subr.bf16.mxu0 0
    %124 = vmatpush1.bf16.msra.mxu0 %v103
    %125 = vmatprep.subr.bf16.mxu0 0
    %126 = vmatpush1.bf16.msra.mxu0 %v104
    %127 = vmatprep.subr.bf16.mxu0 0
    %128 = vmatpush1.bf16.msra.mxu0 %v105
    %129 = vmatprep.subr.bf16.mxu0 0
    %130 = vmatpush1.bf16.msra.mxu0 %v106
    %131 = vmatprep.subr.bf16.mxu0 0
    %132 = vmatpush1.bf16.msra.mxu0 0
    %133 = vmatprep.subr.bf16.mxu0 0
    %134 = vmatpush1.bf16.msra.mxu0 0
    %135 = vmatprep.subr.bf16.mxu0 0
    %136 = vmatpush1.bf16.msra.mxu0 0
    %137 = vmatprep.subr.bf16.mxu0 0
    %138 = vmatpush1.bf16.msra.mxu0 0
    %139 = vmatprep.subr.bf16.mxu0 0
    %140 = vmatpush1.bf16.msra.mxu0 0
    %141 = vmatprep.subr.bf16.mxu0 0
    %142 = vmatpush1.bf16.msra.mxu0 0
    %143 = vmatprep.subr.bf16.mxu0 0
    %144 = vmatpush1.bf16.msra.mxu0 0
    %145 = vmatprep.subr.bf16.mxu0 0
    %146 = vmatpush1.bf16.msra.mxu0 0
    %147 = vmatprep.mubr.bf16.mxu0 0
    %148 = vmatmul.mubr.bf16.gmra.mrb[0].mxu0 %v59
    %v149 = vpop.f32.mrb[0].mxu0
    %v150 = vadd.f32 %v65, %v149
    %v151 = vpop.f32.mrb[0].mxu0
    %v152 = vpop.f32.mrb[0].mxu0
    %v153 = vpop.f32.mrb[0].mxu0
    %154 = vdwg.mxu0
    %155 = vst [vmem:[#allocation7] sm:$0xff] %v150
    // Predicated region
    $region22: #{lin_forward.1} parent=1 // pred_check
      _
    $region23: #{lin_forward.1} parent=1 // pred_check_branch
      %157 = sbr.rel (0) target = $region25
    $region24: #{lin_forward.1} parent=1 // pred_region
      %s159 = ssub.s32 128, 128
      %160 = vsyncadd [#allocation4], %s159
      %s162 = sshll.u32 [#allocation7], 4
      %s163 = int_to_ptr.vmem [resolvable:$true] %s162
      %165 = dma.vmem_to_hbm [thread:$0]  %s163, 128, %s3, [#allocation4]
    $region25: #{lin_forward.1} parent=1 // pred_fallthru
      _
    // Predicated region
    $region26: #{lin_forward.1} parent=1 // pred_check
      _
    $region27: #{lin_forward.1} parent=1 // pred_check_branch
      %167 = sbr.rel (0) target = $region29
    $region28: #{lin_forward.1} parent=1 // pred_region
      %168 = dma.done [#allocation4], 128
    $region29: #{lin_forward.1} parent=1 // pred_fallthru
      _
    %169 = vsyncpa [#allocation3], 1
    %170 = vsyncpa [#allocation6], 1
    %171 = vsyncpa [#allocation4], 1

</llo_original>
